<compile_context>
chip_gen: v6e
topology: v6e:2x2x1
jax: 0.10.0
libtpu: 0.0.40
codegen_flags: <defaults>
</compile_context>

<pallas_src>
import jax
import jax.numpy as jnp
from jax.experimental import pallas as pl
from jax.experimental.pallas import tpu as pltpu


def _round_up(x, m):
    return ((x + m - 1) // m) * m


def _text_processor_kernel(x_ref, w_ref, b_ref, o_ref):
    # One M-tile: Y = relu(X[tm,K] @ W[K,N] + b[1,N]); MXU matmul, f32 epilogue.
    y = jnp.dot(x_ref[...], w_ref[...], preferred_element_type=jnp.float32)
    y = y + b_ref[...].astype(jnp.float32)          # broadcast bias over rows
    o_ref[...] = jnp.maximum(y, 0.0).astype(o_ref.dtype)


def _pick_tile_m(m_pad, k_pad, n_pad, in_bytes, out_bytes, budget_bytes):
    """Largest row tile (<=512, the measured sweet spot) whose double-buffered
    working set fits the VMEM budget (conservative for v7x's 64 MiB)."""
    for tm in (512, 256, 128, 64, 32, 16, 8):
        if tm > m_pad:
            continue
        working = (2 * tm * k_pad * in_bytes        # X, double-buffered
                   + 2 * tm * n_pad * out_bytes     # O, double-buffered
                   + 2 * k_pad * n_pad * in_bytes   # W (resident; budget 2x)
                   + 2 * n_pad * out_bytes)         # bias
        if working <= budget_bytes:
            return tm
    return 8


def text_processor_forward(desc, weight_t, bias, *, compute_dtype=jnp.float32):
    """desc: (bs, num_classes, desc_dim) f32
       weight_t: (desc_dim, hid_dim)  (transpose of the PyTorch Linear weight)
       bias: (hid_dim,)"""
    bs, num_classes, desc_dim = desc.shape
    hid_dim = weight_t.shape[1]
    m = bs * num_classes

    # ---- lane-dense padding: K, N -> multiples of 128; M -> multiple of tile ----
    k_pad = _round_up(desc_dim, 128)
    n_pad = _round_up(hid_dim, 128)
    m8 = _round_up(m, 8)

    in_bytes = jnp.dtype(compute_dtype).itemsize
    out_bytes = jnp.dtype(desc.dtype).itemsize
    tm = _pick_tile_m(m8, k_pad, n_pad, in_bytes, out_bytes,
                      budget_bytes=24 << 20)
    m_pad = _round_up(m, tm)
    grid_m = m_pad // tm

    x2d = desc.reshape(m, desc_dim)
    x2d = jnp.pad(x2d, ((0, m_pad - m), (0, k_pad - desc_dim)))
    w2d = jnp.pad(weight_t, ((0, k_pad - desc_dim), (0, n_pad - hid_dim)))
    b2d = jnp.pad(bias, (0, n_pad - hid_dim)).reshape(1, n_pad).astype(jnp.float32)

    if compute_dtype != x2d.dtype:
        x2d = x2d.astype(compute_dtype)
        w2d = w2d.astype(compute_dtype)

    # explicit scoped-VMEM limit: pipeline buffers + resident W/bias + slack
    working = (2 * tm * k_pad * in_bytes + 2 * tm * n_pad * out_bytes
               + 2 * k_pad * n_pad * in_bytes + 2 * n_pad * out_bytes)
    vmem_limit = int(min(max(working + (4 << 20), 32 << 20), 96 << 20))

    cost = pl.CostEstimate(
        flops=2 * m_pad * k_pad * n_pad,
        transcendentals=0,
        bytes_accessed=(m_pad * k_pad * in_bytes
                        + k_pad * n_pad * in_bytes
                        + m_pad * n_pad * out_bytes),
    )

    out2d = pl.pallas_call(
        _text_processor_kernel,
        out_shape=jax.ShapeDtypeStruct((m_pad, n_pad), desc.dtype),
        grid=(grid_m,),
        in_specs=[
            pl.BlockSpec((tm, k_pad), lambda i: (i, 0)),      # X tile, streamed
            pl.BlockSpec((k_pad, n_pad), lambda i: (0, 0)),   # W, resident
            pl.BlockSpec((1, n_pad), lambda i: (0, 0)),       # bias, resident
        ],
        out_specs=pl.BlockSpec((tm, n_pad), lambda i: (i, 0)),
        compiler_params=pltpu.CompilerParams(
            dimension_semantics=("parallel",),
            vmem_limit_bytes=vmem_limit,
        ),
        cost_estimate=cost,
    )(x2d, w2d, b2d)

    return out2d[:m, :hid_dim].reshape(bs, num_classes, hid_dim)


def init_text_processor_params(key, desc_dim, hid_dim):
    """xavier_normal weight, zero bias (matches reset_parameters_util)."""
    std = (2.0 / (desc_dim + hid_dim)) ** 0.5
    # PyTorch weight is (hid_dim, desc_dim); keep the transposed (K, N) layout.
    w = std * jax.random.normal(key, (hid_dim, desc_dim), dtype=jnp.float32)
    return w.T, jnp.zeros((hid_dim,), dtype=jnp.float32)


def reference_forward(desc, weight_t, bias):
    bs, nc, d = desc.shape
    out = desc.reshape(-1, d) @ weight_t + bias
    return jnp.maximum(out, 0.0).reshape(bs, nc, -1)


if __name__ == "__main__":
    key = jax.random.PRNGKey(0)
    k1, k2, k3, k4, k5 = jax.random.split(key, 5)

    # Case 1: tiny shape implied by the module (pads to a single 8x128 tile).
    bs, nc, d, h = 2, 4, 32, 32
    desc = jax.random.normal(k1, (bs, nc, d), dtype=jnp.float32)
    wt, b = init_text_processor_params(k2, d, h)
    out = jax.block_until_ready(text_processor_forward(desc, wt, b))
    ref = reference_forward(desc, wt, b)
    assert out.shape == (bs, nc, h)
    assert jnp.allclose(out, ref, atol=1e-5, rtol=1e-5)

    # Case 2: unaligned shapes that exercise M tiling + K/N padding + bias path.
    bs, nc, d, h = 3, 350, 96, 200
    desc = jax.random.normal(k3, (bs, nc, d), dtype=jnp.float32)
    wt, _ = init_text_processor_params(k4, d, h)
    b = 0.1 * jax.random.normal(k5, (h,), dtype=jnp.float32)
    out = jax.block_until_ready(text_processor_forward(desc, wt, b))
    ref = reference_forward(desc, wt, b)
    assert out.shape == (bs, nc, h)
    assert jnp.allclose(out, ref, atol=2e-4, rtol=2e-4)

    print("KERNEL_OK")
</pallas_src>

<mosaic_0001>
module attributes {stable_mosaic.version = 11 : i64} {
  func.func @_text_processor_kernel(%arg0: i32, %arg1: memref<8x128xf32, #tpu.memory_space<vmem>>, %arg2: memref<128x128xf32, #tpu.memory_space<vmem>>, %arg3: memref<1x128xf32, #tpu.memory_space<vmem>>, %arg4: memref<8x128xf32, #tpu.memory_space<vmem>>) attributes {dimension_semantics = [#tpu.dimension_semantics<parallel>], iteration_bounds = array<i64: 1>, scalar_prefetch = 0 : i64, scratch_operands = 0 : i64, tpu.core_type = #tpu.core_type<tc>, window_params = [{transform_indices = @transform_0, window_bounds = array<i64: 8, 128>}, {pipeline_mode = #tpu.pipeline_mode<synchronous>, transform_indices = @transform_1, window_bounds = array<i64: 128, 128>}, {pipeline_mode = #tpu.pipeline_mode<synchronous>, transform_indices = @transform_2, window_bounds = array<i64: 1, 128>}, {transform_indices = @transform_3, window_bounds = array<i64: 8, 128>}]} {
    %c0 = arith.constant 0 : index
    %c0_0 = arith.constant 0 : index
    %0 = vector.load %arg1[%c0, %c0_0] : memref<8x128xf32, #tpu.memory_space<vmem>>, vector<8x128xf32>
    %c0_1 = arith.constant 0 : index
    %c0_2 = arith.constant 0 : index
    %1 = vector.load %arg2[%c0_1, %c0_2] : memref<128x128xf32, #tpu.memory_space<vmem>>, vector<128x128xf32>
    %cst = arith.constant dense<0.000000e+00> : vector<8x128xf32>
    %2 = tpu.matmul %0, %1, %cst {dimension_numbers = #tpu.dot_dimension_numbers<[1], [0], [0], [1], [0, 0, 1, 1], [], []>} : vector<8x128xf32>, vector<128x128xf32>, vector<8x128xf32> -> vector<8x128xf32>
    %c0_3 = arith.constant 0 : index
    %c0_4 = arith.constant 0 : index
    %3 = vector.load %arg3[%c0_3, %c0_4] : memref<1x128xf32, #tpu.memory_space<vmem>>, vector<1x128xf32>
    %4 = vector.broadcast %3 : vector<1x128xf32> to vector<8x128xf32>
    %5 = arith.addf %2, %4 : vector<8x128xf32>
    %cst_5 = arith.constant 0.000000e+00 : f32
    %6 = vector.broadcast %cst_5 : f32 to vector<8x128xf32>
    %7 = arith.maximumf %5, %6 : vector<8x128xf32>
    %c0_6 = arith.constant 0 : index
    %c0_7 = arith.constant 0 : index
    %8 = vector.load %arg4[%c0_6, %c0_7] : memref<8x128xf32, #tpu.memory_space<vmem>>, vector<8x128xf32>
    tpu.vector_store %arg4[%c0_6, %c0_7], %7 {strides = array<i32>} : memref<8x128xf32, #tpu.memory_space<vmem>>, vector<8x128xf32>,
    return
  }
  func.func @transform_0(%arg0: i32) -> (i32, i32) {
    %c0_i32 = arith.constant 0 : i32
    %c0_i32_0 = arith.constant 0 : i32
    return %arg0, %c0_i32 : i32, i32
  }
  func.func @transform_1(%arg0: i32) -> (i32, i32) {
    %c0_i32 = arith.constant 0 : i32
    %c0_i32_0 = arith.constant 0 : i32
    %c0_i32_1 = arith.constant 0 : i32
    return %c0_i32, %c0_i32_0 : i32, i32
  }
  func.func @transform_2(%arg0: i32) -> (i32, i32) {
    %c0_i32 = arith.constant 0 : i32
    %c0_i32_0 = arith.constant 0 : i32
    %c0_i32_1 = arith.constant 0 : i32
    return %c0_i32, %c0_i32_0 : i32, i32
  }
  func.func @transform_3(%arg0: i32) -> (i32, i32) {
    %c0_i32 = arith.constant 0 : i32
    %c0_i32_0 = arith.constant 0 : i32
    return %arg0, %c0_i32 : i32, i32
  }
}

</mosaic_0001>

<llo_original>
// kernel: tpu_custom_call.1
$region0: #{tpu_custom_call.1}
  #allocation0 [shape = 'u32[]', space=smem, size = 0x4, offset = 0x4, fixed_abs, tag = 'smem constant byte address 0x4 - core index']
  #allocation1 [shape = 'u32[144,128]{1,0:T(1,128)}', space=vmem, size = 0x12000, scoped, tag = 'internal scratch']
  %s0 = inlined_call_operand.hbm [shape: f32[8,128], index: 0, kind: input, shape index: {}]
  %s1 = inlined_call_operand.hbm [shape: f32[128,128], index: 1, kind: input, shape index: {}]
  %s2 = inlined_call_operand.vmem [shape: f32[1,128], index: 2, kind: input, shape index: {}]
  %s3 = inlined_call_operand.hbm [shape: f32[8,128], index: 3, kind: output, shape index: {}]
  %s4 = sld [smem:[#allocation0]]
  $region30: #{tpu_custom_call.1} parent=0
    _
  %s6 = ssub.s32 1, %s4
  %s7 = scalar_select 0, %s6, %s4
  $region1: #{tpu_custom_call.1} parent=0
    #allocation2 [shape = 'u8[4096]{0}', space=vmem, size = 0x1000, scoped, tag = 'input window, operand 0, single buffered']
    #allocation3 [shape = 's32[1]{0}', space=sflag, size = 0x4, scoped, tag = 'scoped memory for tpu_custom_call.1']
    #allocation4 [shape = 's32[1]{0}', space=sflag, size = 0x4, scoped, tag = 'scoped memory for tpu_custom_call.1']
    #allocation5 [shape = 'u8[65536]{0}', space=vmem, size = 0x10000, scoped, tag = 'input window, operand 1, single buffered']
    #allocation6 [shape = 's32[1]{0}', space=sflag, size = 0x4, scoped, tag = 'scoped memory for tpu_custom_call.1']
    #allocation7 [shape = 'u8[4096]{0}', space=vmem, size = 0x1000, scoped, tag = 'output window, operand 0, single buffered']
    %8 = vsyncpa [#allocation3], 0
    %9 = vsyncpa [#allocation6], 0
    %10 = vsyncpa [#allocation4], 0
    // Predicated region
    $region2: #{tpu_custom_call.1} parent=1 // pred_check
      _
    $region3: #{tpu_custom_call.1} parent=1 // pred_check_branch
      %12 = sbr.rel (0) target = $region5
    $region4: #{tpu_custom_call.1} parent=1 // pred_region
      %s14 = ssub.s32 128, 128
      %15 = vsyncadd [#allocation3], %s14
      %s17 = sshll.u32 [#allocation2], 4
      %s18 = int_to_ptr.vmem [resolvable:$true] %s17
      %20 = dma.hbm_to_vmem [thread:$0]  %s0, 128, %s18, [#allocation3]
    $region5: #{tpu_custom_call.1} parent=1 // pred_fallthru
      _
    // Predicated region
    $region6: #{tpu_custom_call.1} parent=1 // pred_check
      _
    $region7: #{tpu_custom_call.1} parent=1 // pred_check_branch
      %22 = sbr.rel (0) target = $region9
    $region8: #{tpu_custom_call.1} parent=1 // pred_region
      %s24 = ssub.s32 2048, 2048
      %25 = vsyncadd [#allocation6], %s24
      %s26 = sshll.u32 [#allocation5], 4
      %s27 = int_to_ptr.vmem [resolvable:$true] %s26
      %32 = dma.hbm_to_vmem [thread:$0]  %s1, 2048, %s27, [#allocation6], 128, 128, 8
    $region9: #{tpu_custom_call.1} parent=1 // pred_fallthru
      _
    // Predicated region
    $region10: #{tpu_custom_call.1} parent=1 // pred_check
      _
    $region11: #{tpu_custom_call.1} parent=1 // pred_check_branch
      %34 = sbr.rel (0) target = $region13
    $region12: #{tpu_custom_call.1} parent=1 // pred_region
      _
    $region13: #{tpu_custom_call.1} parent=1 // pred_fallthru
      _
    // Predicated region
    $region14: #{tpu_custom_call.1} parent=1 // pred_check
      _
    $region15: #{tpu_custom_call.1} parent=1 // pred_check_branch
      %36 = sbr.rel (0) target = $region17
    $region16: #{tpu_custom_call.1} parent=1 // pred_region
      %37 = dma.done [#allocation3], 128
    $region17: #{tpu_custom_call.1} parent=1 // pred_fallthru
      _
    // Predicated region
    $region18: #{tpu_custom_call.1} parent=1 // pred_check
      _
    $region19: #{tpu_custom_call.1} parent=1 // pred_check_branch
      %39 = sbr.rel (0) target = $region21
    $region20: #{tpu_custom_call.1} parent=1 // pred_region
      %40 = dma.done [#allocation6], 2048
    $region21: #{tpu_custom_call.1} parent=1 // pred_fallthru
      _
    %v41 = vld [vmem:[#allocation2] sm:$0xff]
    %v42 = vld [vmem:[#allocation5] sm:$0xff]
    %v43 = vld [vmem:[#allocation5 + $0x8] sm:$0xff]
    %v44 = vld [vmem:[#allocation5 + $0x10] sm:$0xff]
    %v45 = vld [vmem:[#allocation5 + $0x18] sm:$0xff]
    %v46 = vld [vmem:[#allocation5 + $0x20] sm:$0xff]
    %v47 = vld [vmem:[#allocation5 + $0x28] sm:$0xff]
    %v48 = vld [vmem:[#allocation5 + $0x30] sm:$0xff]
    %v49 = vld [vmem:[#allocation5 + $0x38] sm:$0xff]
    %v50 = vld [vmem:[#allocation5 + $0x40] sm:$0xff]
    %v51 = vld [vmem:[#allocation5 + $0x48] sm:$0xff]
    %v52 = vld [vmem:[#allocation5 + $0x50] sm:$0xff]
    %v53 = vld [vmem:[#allocation5 + $0x58] sm:$0xff]
    %v54 = vld [vmem:[#allocation5 + $0x60] sm:$0xff]
    %v55 = vld [vmem:[#allocation5 + $0x68] sm:$0xff]
    %v56 = vld [vmem:[#allocation5 + $0x70] sm:$0xff]
    %v57 = vld [vmem:[#allocation5 + $0x78] sm:$0xff]
    %v58 = vld [vmem:[%s2] sm:$0x1]
    %v60 = vlaneseq
    %v61 = vshrl.u32 %v60, 7
    %v62 = vsub.s32 0, %v61
    %v63 = vrot.slane %v58, %v62
    %65 = vmatprep.subr.mxu0 0.0
    %66 = vmatpush1.msra.mxu0 %v57
    %67 = vmatprep.subr.mxu0 0.0
    %68 = vmatpush1.msra.mxu0 %v56
    %69 = vmatprep.subr.mxu0 0.0
    %70 = vmatpush1.msra.mxu0 %v55
    %71 = vmatprep.subr.mxu0 0.0
    %72 = vmatpush1.msra.mxu0 %v54
    %73 = vmatprep.subr.mxu0 0.0
    %74 = vmatpush1.msra.mxu0 %v53
    %75 = vmatprep.subr.mxu0 0.0
    %76 = vmatpush1.msra.mxu0 %v52
    %77 = vmatprep.subr.mxu0 0.0
    %78 = vmatpush1.msra.mxu0 %v51
    %79 = vmatprep.subr.mxu0 0.0
    %80 = vmatpush1.msra.mxu0 %v50
    %81 = vmatprep.subr.mxu0 0.0
    %82 = vmatpush1.msra.mxu0 %v49
    %83 = vmatprep.subr.mxu0 0.0
    %84 = vmatpush1.msra.mxu0 %v48
    %85 = vmatprep.subr.mxu0 0.0
    %86 = vmatpush1.msra.mxu0 %v47
    %87 = vmatprep.subr.mxu0 0.0
    %88 = vmatpush1.msra.mxu0 %v46
    %89 = vmatprep.subr.mxu0 0.0
    %90 = vmatpush1.msra.mxu0 %v45
    %91 = vmatprep.subr.mxu0 0.0
    %92 = vmatpush1.msra.mxu0 %v44
    %93 = vmatprep.subr.mxu0 0.0
    %94 = vmatpush1.msra.mxu0 %v43
    %95 = vmatprep.subr.mxu0 0.0
    %96 = vmatpush1.msra.mxu0 %v42
    %97 = vmatprep.subr.mxu0 0.0
    %98 = vmatpush2.msra.mxu0 0.0
    %99 = vmatprep.subr.mxu0 0.0
    %100 = vmatpush2.msra.mxu0 0.0
    %101 = vmatprep.subr.mxu0 0.0
    %102 = vmatpush2.msra.mxu0 0.0
    %103 = vmatprep.subr.mxu0 0.0
    %104 = vmatpush2.msra.mxu0 0.0
    %105 = vmatprep.subr.mxu0 0.0
    %106 = vmatpush2.msra.mxu0 0.0
    %107 = vmatprep.subr.mxu0 0.0
    %108 = vmatpush2.msra.mxu0 0.0
    %109 = vmatprep.subr.mxu0 0.0
    %110 = vmatpush2.msra.mxu0 0.0
    %111 = vmatprep.subr.mxu0 0.0
    %112 = vmatpush2.msra.mxu0 0.0
    %113 = vmatprep.subr.mxu0 0.0
    %114 = vmatpush2.msra.mxu0 0.0
    %115 = vmatprep.subr.mxu0 0.0
    %116 = vmatpush2.msra.mxu0 0.0
    %117 = vmatprep.subr.mxu0 0.0
    %118 = vmatpush2.msra.mxu0 0.0
    %119 = vmatprep.subr.mxu0 0.0
    %120 = vmatpush2.msra.mxu0 0.0
    %121 = vmatprep.subr.mxu0 0.0
    %122 = vmatpush2.msra.mxu0 0.0
    %123 = vmatprep.subr.mxu0 0.0
    %124 = vmatpush2.msra.mxu0 0.0
    %125 = vmatprep.subr.mxu0 0.0
    %126 = vmatpush2.msra.mxu0 0.0
    %127 = vmatprep.subr.mxu0 0.0
    %128 = vmatpush2.msra.mxu0 0.0
    %129 = vmatprep.mubr.f32.mxu0 0.0
    %130 = vmatmul.mubr.f32.gmra.mxu0 %v41
    %v131 = vpop.f32.mrf.mxu0
    %v132 = vadd.f32 %v63, %v131
    %v133 = vpop.f32.mrf.mxu0
    %134 = vdwg.mxu0
    %v135 = vmax.f32 %v132, 0.0
    %136 = vst [vmem:[#allocation7] sm:$0xff] %v135
    // Predicated region
    $region22: #{tpu_custom_call.1} parent=1 // pred_check
      _
    $region23: #{tpu_custom_call.1} parent=1 // pred_check_branch
      %138 = sbr.rel (0) target = $region25
    $region24: #{tpu_custom_call.1} parent=1 // pred_region
      %s140 = ssub.s32 128, 128
      %141 = vsyncadd [#allocation4], %s140
      %s143 = sshll.u32 [#allocation7], 4
      %s144 = int_to_ptr.vmem [resolvable:$true] %s143
      %146 = dma.vmem_to_hbm [thread:$0]  %s144, 128, %s3, [#allocation4]
    $region25: #{tpu_custom_call.1} parent=1 // pred_fallthru
      _
    // Predicated region
    $region26: #{tpu_custom_call.1} parent=1 // pred_check
      _
    $region27: #{tpu_custom_call.1} parent=1 // pred_check_branch
      %148 = sbr.rel (0) target = $region29
    $region28: #{tpu_custom_call.1} parent=1 // pred_region
      %149 = dma.done [#allocation4], 128
    $region29: #{tpu_custom_call.1} parent=1 // pred_fallthru
      _
    %150 = vsyncpa [#allocation3], 1
    %151 = vsyncpa [#allocation6], 1
    %152 = vsyncpa [#allocation4], 1

</llo_original>
